<compile_context>
chip_gen: v5e
topology: v5e:2x2
jax: 0.10.0
libtpu: 0.0.40
codegen_flags: <defaults>
</compile_context>

<pallas_src>
import functools

import jax
import jax.numpy as jnp
from jax.experimental import pallas as pl
from jax.experimental.pallas import tpu as pltpu


def _ce_partial_kernel(x_ref, t_ref, out_ref, *, n_rows, block_rows):
    """Per-tile partial sum of -log_softmax(x)[i, target[i]] over valid rows."""
    pid = pl.program_id(0)

    x = x_ref[...].astype(jnp.float32)            # (TN, C), upcast in VMEM
    t = t_ref[...]                                # (TN, 1) int32

    # Numerically-stable logsumexp along the class (lane) axis.
    m = jnp.max(x, axis=-1, keepdims=True)        # (TN, 1)
    shifted = x - m                               # (TN, C)
    sumexp = jnp.sum(jnp.exp(shifted), axis=-1, keepdims=True)   # (TN, 1)

    # Gather shifted[i, t[i]] with a one-hot lane compare (vectorized gather).
    cols = jax.lax.broadcasted_iota(jnp.int32, shifted.shape, 1)
    picked = jnp.sum(jnp.where(cols == t, shifted, 0.0), axis=-1, keepdims=True)

    # loss_i = logsumexp(x_i) - x[i, t_i]; the row-max m cancels.
    loss_i = jnp.log(sumexp) - picked             # (TN, 1)

    # Mask rows beyond the true batch size (ragged last tile -> padded garbage).
    rows = pid * block_rows + jax.lax.broadcasted_iota(jnp.int32, loss_i.shape, 0)
    loss_i = jnp.where(rows < n_rows, loss_i, 0.0)

    # Lane-dense full-block store of this tile's partial sum.
    out_ref[...] = jnp.full(out_ref.shape, jnp.sum(loss_i), dtype=out_ref.dtype)


def cross_entropy_loss(logits, target, *, block_rows=None, target_block_bytes=4 << 20):
    """logits: (N, C) float (f32/bf16); target: (N,) int. Returns scalar f32 loss."""
    N, C = logits.shape
    t2 = target.astype(jnp.int32).reshape(N, 1)

    itemsize = jnp.dtype(logits.dtype).itemsize
    if block_rows is None:
        # ~4 MiB logits blocks (fits v7x's 64 MiB VMEM double-buffered, big enough
        # to amortize per-grid-step overhead on v5e/v6e), capped at 1024 rows.
        block_rows = max(8, min(1024, target_block_bytes // max(1, C * itemsize)))
    # Round to a multiple of 8 sublanes; never bigger than the padded batch.
    block_rows = int(min(((block_rows + 7) // 8) * 8, ((N + 7) // 8) * 8))

    grid = pl.cdiv(N, block_rows)

    # Explicit scoped-VMEM budget: 2x double-buffered inputs + outputs + headroom.
    block_bytes = block_rows * C * itemsize
    vmem_limit = 2 * block_bytes + 2 * block_rows * 4 + 2 * 8 * 128 * 4 + (4 << 20)
    vmem_limit = int(min(max(vmem_limit, 32 << 20), 64 << 20))

    kernel = functools.partial(_ce_partial_kernel, n_rows=N, block_rows=block_rows)

    partials = pl.pallas_call(
        kernel,
        out_shape=jax.ShapeDtypeStruct((grid, 8, 128), jnp.float32),
        grid_spec=pltpu.PrefetchScalarGridSpec(
            num_scalar_prefetch=0,
            grid=(grid,),
            in_specs=[
                pl.BlockSpec((block_rows, C), lambda i: (i, 0)),   # logits tile
                pl.BlockSpec((block_rows, 1), lambda i: (i, 0)),   # targets tile
            ],
            out_specs=pl.BlockSpec((1, 8, 128), lambda i: (i, 0, 0)),
        ),
        compiler_params=pltpu.CompilerParams(
            dimension_semantics=("parallel",),     # rows independent -> megacore
            vmem_limit_bytes=vmem_limit,
        ),
    )(logits, t2)

    # Finalize the mean over the *true* N in the wrapper (tiny reduce).
    return jnp.sum(partials[:, 0, 0]) / jnp.float32(N)


if __name__ == "__main__":
    key = jax.random.PRNGKey(0)
    k1, k2, k3, k4 = jax.random.split(key, 4)

    # Test 1: small single-tile case (matches the module's toy shapes).
    N1, C1 = 8, 32
    logits1 = jax.random.normal(k1, (N1, C1), dtype=jnp.float32)
    target1 = jax.random.randint(k2, (N1,), 0, C1, dtype=jnp.int32)
    loss1 = jax.block_until_ready(cross_entropy_loss(logits1, target1))
    ref1 = -jnp.mean(jax.nn.log_softmax(logits1, axis=-1)[jnp.arange(N1), target1])
    assert jnp.allclose(loss1, ref1, atol=1e-5, rtol=1e-5), (loss1, ref1)

    # Test 2: ragged batch across multiple tiles, bf16 logits kept in source dtype
    # (exercises the grid, the padded-row masking, and the in-kernel upcast).
    N2, C2 = 20, 160
    logits2 = jax.random.normal(k3, (N2, C2), dtype=jnp.bfloat16)
    target2 = jax.random.randint(k4, (N2,), 0, C2, dtype=jnp.int32)
    loss2 = jax.block_until_ready(cross_entropy_loss(logits2, target2, block_rows=8))
    ref2 = -jnp.mean(
        jax.nn.log_softmax(logits2.astype(jnp.float32), axis=-1)[jnp.arange(N2), target2]
    )
    assert jnp.allclose(loss2, ref2, atol=1e-3, rtol=1e-3), (loss2, ref2)

    print("KERNEL_OK")
</pallas_src>

<mosaic_0001>
module attributes {stable_mosaic.version = 11 : i64} {
  func.func @_ce_partial_kernel(%arg0: i32, %arg1: memref<8x32xf32, #tpu.memory_space<vmem>>, %arg2: memref<8x1xi32, #tpu.memory_space<vmem>>, %arg3: memref<1x8x128xf32, #tpu.memory_space<vmem>>) attributes {dimension_semantics = [#tpu.dimension_semantics<parallel>], iteration_bounds = array<i64: 1>, scalar_prefetch = 0 : i64, scratch_operands = 0 : i64, tpu.core_type = #tpu.core_type<tc>, window_params = [{transform_indices = @transform_0, window_bounds = array<i64: 8, 32>}, {transform_indices = @transform_1, window_bounds = array<i64: 8, 1>}, {transform_indices = @transform_2, window_bounds = array<i64: 1, 8, 128>}]} {
    %c0 = arith.constant 0 : index
    %c0_0 = arith.constant 0 : index
    %0 = vector.load %arg1[%c0, %c0_0] : memref<8x32xf32, #tpu.memory_space<vmem>>, vector<8x32xf32>
    %c0_1 = arith.constant 0 : index
    %c0_2 = arith.constant 0 : index
    %1 = vector.load %arg2[%c0_1, %c0_2] : memref<8x1xi32, #tpu.memory_space<vmem>>, vector<8x1xi32>
    %cst = arith.constant dense<0xFF800000> : vector<8xf32>
    %2 = vector.multi_reduction <maximumf>, %0, %cst [1] : vector<8x32xf32> to vector<8xf32>
    %3 = vector.shape_cast %2 : vector<8xf32> to vector<8x1xf32>
    %4 = vector.broadcast %3 : vector<8x1xf32> to vector<8x32xf32>
    %5 = arith.subf %0, %4 : vector<8x32xf32>
    %6 = math.exp %5 : vector<8x32xf32>
    %cst_3 = arith.constant dense<0.000000e+00> : vector<8xf32>
    %7 = vector.multi_reduction <add>, %6, %cst_3 [1] : vector<8x32xf32> to vector<8xf32>
    %8 = vector.shape_cast %7 : vector<8xf32> to vector<8x1xf32>
    %9 = tpu.iota {dimensions = array<i32: 1>} : vector<8x32xi32>
    %10 = vector.broadcast %1 : vector<8x1xi32> to vector<8x32xi32>
    %11 = arith.cmpi eq, %9, %10 : vector<8x32xi32>
    %cst_4 = arith.constant 0.000000e+00 : f32
    %12 = vector.broadcast %cst_4 : f32 to vector<8x32xf32>
    %13 = arith.select %11, %5, %12 : vector<8x32xi1>, vector<8x32xf32>
    %cst_5 = arith.constant dense<0.000000e+00> : vector<8xf32>
    %14 = vector.multi_reduction <add>, %13, %cst_5 [1] : vector<8x32xf32> to vector<8xf32>
    %15 = vector.shape_cast %14 : vector<8xf32> to vector<8x1xf32>
    %16 = math.log %8 : vector<8x1xf32>
    %17 = arith.subf %16, %15 : vector<8x1xf32>
    %c8_i32 = arith.constant 8 : i32
    %18 = arith.muli %arg0, %c8_i32 : i32
    %19 = tpu.iota {dimensions = array<i32: 0>} : vector<8x1xi32>
    %20 = vector.broadcast %18 : i32 to vector<8x1xi32>
    %21 = arith.addi %20, %19 : vector<8x1xi32>
    %c8_i32_6 = arith.constant 8 : i32
    %22 = vector.broadcast %c8_i32_6 : i32 to vector<8x1xi32>
    %23 = arith.cmpi slt, %21, %22 : vector<8x1xi32>
    %cst_7 = arith.constant 0.000000e+00 : f32
    %24 = vector.broadcast %cst_7 : f32 to vector<8x1xf32>
    %25 = arith.select %23, %17, %24 : vector<8x1xi1>, vector<8x1xf32>
    %26 = vector.shape_cast %25 : vector<8x1xf32> to vector<1x8x1xf32>
    %cst_8 = arith.constant dense<0.000000e+00> : vector<1xf32>
    %27 = vector.multi_reduction <add>, %26, %cst_8 [1, 2] : vector<1x8x1xf32> to vector<1xf32>
    %28 = vector.shape_cast %27 : vector<1xf32> to vector<1x1x1xf32>
    %29 = vector.extract %28[0, 0, 0] : f32 from vector<1x1x1xf32>
    %30 = vector.broadcast %29 : f32 to vector<1x8x128xf32>
    %c0_9 = arith.constant 0 : index
    %c0_10 = arith.constant 0 : index
    %c0_11 = arith.constant 0 : index
    %31 = vector.load %arg3[%c0_9, %c0_10, %c0_11] : memref<1x8x128xf32, #tpu.memory_space<vmem>>, vector<1x8x128xf32>
    tpu.vector_store %arg3[%c0_9, %c0_10, %c0_11], %30 {strides = array<i32>} : memref<1x8x128xf32, #tpu.memory_space<vmem>>, vector<1x8x128xf32>,
    return
  }
  func.func @transform_0(%arg0: i32) -> (i32, i32) {
    %c0_i32 = arith.constant 0 : i32
    %c0_i32_0 = arith.constant 0 : i32
    return %arg0, %c0_i32 : i32, i32
  }
  func.func @transform_1(%arg0: i32) -> (i32, i32) {
    %c0_i32 = arith.constant 0 : i32
    %c0_i32_0 = arith.constant 0 : i32
    return %arg0, %c0_i32 : i32, i32
  }
  func.func @transform_2(%arg0: i32) -> (i32, i32, i32) {
    %c0_i32 = arith.constant 0 : i32
    %c0_i32_0 = arith.constant 0 : i32
    %c0_i32_1 = arith.constant 0 : i32
    return %arg0, %c0_i32, %c0_i32_0 : i32, i32, i32
  }
}

</mosaic_0001>

<llo_original>
// kernel: tpu_custom_call.1
$region0: #{tpu_custom_call.1}
  #allocation0 [shape = 'u32[]', space=smem, size = 0x4, offset = 0x4, fixed_abs, tag = 'smem constant byte address 0x4 - core index']
  #allocation1 [shape = 'u32[72,128]{1,0:T(1,128)}', space=vmem, size = 0x9000, scoped, tag = 'internal scratch']
  %s0 = inlined_call_operand.vmem [shape: f32[8,32], index: 0, kind: input, shape index: {}]
  %s1 = inlined_call_operand.vmem [shape: s32[8,1], index: 1, kind: input, shape index: {}]
  %s2 = inlined_call_operand.hbm [shape: f32[1,8,128], index: 2, kind: output, shape index: {}]
  %s3 = sld [smem:[#allocation0]]
  $region18: #{tpu_custom_call.1} parent=0
    _
  %s5 = ssub.s32 1, %s3
  %s6 = scalar_select 0, %s5, %s3
  $region1: #{tpu_custom_call.1} parent=0
    #allocation2 [shape = 'u8[4096]{0}', space=vmem, size = 0x1000, scoped, tag = 'output window, operand 0, single buffered']
    #allocation3 [shape = 's32[1]{0}', space=sflag, size = 0x4, scoped, tag = 'scoped memory for tpu_custom_call.1']
    %7 = vsyncpa [#allocation3], 0
    // Predicated region
    $region2: #{tpu_custom_call.1} parent=1 // pred_check
      _
    $region3: #{tpu_custom_call.1} parent=1 // pred_check_branch
      %9 = sbr.rel (0) target = $region5
    $region4: #{tpu_custom_call.1} parent=1 // pred_region
      _
    $region5: #{tpu_custom_call.1} parent=1 // pred_fallthru
      _
    // Predicated region
    $region6: #{tpu_custom_call.1} parent=1 // pred_check
      _
    $region7: #{tpu_custom_call.1} parent=1 // pred_check_branch
      %11 = sbr.rel (0) target = $region9
    $region8: #{tpu_custom_call.1} parent=1 // pred_region
      _
    $region9: #{tpu_custom_call.1} parent=1 // pred_fallthru
      _
    %v12 = vld [vmem:[%s0] sm:$0xff]
    %v13 = vld [vmem:[%s1] sm:$0xff]
    %vm14 = vcmask 261120
    %v15 = vsel %vm14, %v12, -inf
    %16 = vmax.xlane.f32.xlu0 %v15
    %v17 = vpop.xlane.xlu0 %16
    %v18 = vsub.f32 %v12, %v17
    %v19 = vmul.f32 %v18, 1.442695
    %v20 = vpow.pop %v19
    %v21 = vsel %vm14, %v20, 0.0
    %22 = vadd.xlane.f32.xlu0 %v21
    %v23 = vpop.xlane.xlu0 %22
    %v24 = vlaneseq
    %v25 = vand.u32 %v24, 127
    %26 = vset.pattern.permute.xlu0 0
    %27 = vperm.xlu0 %26, %v13
    %v28 = vpop.permute.xlu0 %27
    %vm29 = vcmp.eq.s32.totalorder %v25, %v28
    %v30 = vsel %vm29, %v18, 0.0
    %v31 = vsel %vm14, %v30, 0.0
    %32 = vadd.xlane.f32.xlu0 %v31
    %v33 = vpop.xlane.xlu0 %32
    %v34 = vlog2.pop %v23
    %v35 = vmul.f32 %v34, 0.6931472
    %v36 = vsub.f32 %v35, %v33
    %s37 = smul.u32 0, 8
    %v38 = vlaneseq
    %v39 = vshrl.u32 %v38, 7
    %v40 = vstv %s37
    %v41 = vadd.s32 %v40, %v39
    %vm42 = vcmp.lt.s32.totalorder %v41, 8
    %v43 = vsel %vm42, %v36, 0.0
    %vm44 = vcmask 7168
    %v45 = vsel %vm44, %v43, 0.0
    %46 = vadd.xlane.f32.xlu0 %v45
    %v47 = vpop.xlane.xlu0 %46
    %v48 = vrot.slane %v47, 4
    %v49 = vadd.f32 %v47, %v48
    %v50 = vrot.slane %v49, 2
    %v51 = vadd.f32 %v49, %v50
    %v52 = vrot.slane %v51, 1
    %v53 = vadd.f32 %v51, %v52
    %s54 = vtos %v53
    %v55 = vstv %s54
    %56 = vst [vmem:[#allocation2] sm:$0xff] %v55
    // Predicated region
    $region10: #{tpu_custom_call.1} parent=1 // pred_check
      _
    $region11: #{tpu_custom_call.1} parent=1 // pred_check_branch
      %58 = sbr.rel (0) target = $region13
    $region12: #{tpu_custom_call.1} parent=1 // pred_region
      %60 = vsyncadd [#allocation3], 0
      %s62 = sshll.u32 [#allocation2], 4
      %s63 = int_to_ptr.vmem [resolvable:$true] %s62
      %s64 = sshll.u32 %s2, 4
      %s65 = int_to_ptr.hbm [resolvable:$true] %s64
      %67 = dma.vmem_to_hbm [thread:$0]  %s63, 128, %s65, [#allocation3]
    $region13: #{tpu_custom_call.1} parent=1 // pred_fallthru
      _
    // Predicated region
    $region14: #{tpu_custom_call.1} parent=1 // pred_check
      _
    $region15: #{tpu_custom_call.1} parent=1 // pred_check_branch
      %69 = sbr.rel (0) target = $region17
    $region16: #{tpu_custom_call.1} parent=1 // pred_region
      %71 = dma.done [#allocation3], 128
    $region17: #{tpu_custom_call.1} parent=1 // pred_fallthru
      _
    %72 = vsyncpa [#allocation3], 1

</llo_original>
